<compile_context>
chip_gen: v5e
topology: v5e:2x2
jax: 0.10.0
libtpu: 0.0.40
codegen_flags: <defaults>
</compile_context>

<pallas_src>
import math
import numpy as np
import jax
import jax.numpy as jnp
from jax import lax
from jax.experimental import pallas as pl

B, S, H = 2, 8, 32
BS = B * S                       # 16 flattened (batch, seq) rows
NUM_HEADS = 8
HEAD_DIM = H // NUM_HEADS        # 4
WIDE = NUM_HEADS * BS            # 128 = lane-dense "head-major" key axis
NUM_LABELS = 4
OUTW = 8                         # padded logits width
VOCAB = 100
LN_EPS = 1e-5
SCALE = 1.0 / math.sqrt(HEAD_DIM)

# ---- slab A (width 128, f32) row layout ----
R_H = 0           # hidden states         (16, 32)
R_WQKV = 16       # fused QKV weight      (32, 96)
R_OPW = 48        # out_proj weight^T     (32, 32)
R_F1W = 80        # fc1 weight^T          (32, 128)
R_EHT = 112       # key replication const (128, 16)
R_MVH = 240       # head lane mask const  (128, 32)
R_ALLOW = 368     # allowed (pad+batch)   (16, 128)
R_SEGH = 384      # head-block seg-sum    (128, 128)
R_SEGP = 512      # batch pooling seg     (2, 16)
R_MCOL = 520      # attention mask col    (16, 1)
R_VEC = 536       # small vectors         (8, 128)
ROWS_A = 544
# vec rows: 0 ln_g, 1 ln_b, 2 qkv_b, 3 op_b, 4 f1_b, 5 f2_w, 6 f2_b, 7 c2_b

# ---- slab B (width 256, f32) row layout ----
RB_C1W = 0        # c1 weight^T           (32, 256)
RB_C1B = 32       # c1 bias               (1, 256)
RB_C2W = 40       # c2 weight (row-major) (8, 256)   rows 4..7 zero
ROWS_B = 48


def model_kernel(a_ref, b_ref, out_ref):
    f32, bf16 = jnp.float32, jnp.bfloat16

    x = a_ref[R_H:R_H + BS, 0:H]                                   # (16, 32)
    ln_g = a_ref[R_VEC + 0:R_VEC + 1, 0:H]
    ln_b = a_ref[R_VEC + 1:R_VEC + 2, 0:H]

    # ---- LayerNorm (f32): var = E[x^2] - mu^2 (independent reductions) ----
    mu = jnp.mean(x, axis=-1, keepdims=True)
    msq = jnp.mean(x * x, axis=-1, keepdims=True)
    var = msq - mu * mu
    hn = (x - mu) * lax.rsqrt(var + LN_EPS) * ln_g + ln_b          # (16, 32)

    # ---- fused QKV projection (single MXU push, bf16 operands) ----
    w_qkv = a_ref[R_WQKV:R_WQKV + H, 0:3 * H].astype(bf16)         # (32, 96)
    qkv_b = a_ref[R_VEC + 2:R_VEC + 3, 0:3 * H]
    qkv = jnp.dot(hn.astype(bf16), w_qkv,
                  preferred_element_type=f32) + qkv_b              # (16, 96)
    q = qkv[:, 0:H] * SCALE
    k = qkv[:, H:2 * H]
    v = qkv[:, 2 * H:3 * H]

    # ---- replicate k/v across heads into (128, 32) head-masked buffers ----
    eht = a_ref[R_EHT:R_EHT + WIDE, 0:BS].astype(bf16)             # (128, 16)
    mvh = a_ref[R_MVH:R_MVH + WIDE, 0:H]                           # (128, 32)
    k_rows = jnp.dot(eht, k.astype(bf16), preferred_element_type=f32) * mvh
    v_rows = jnp.dot(eht, v.astype(bf16), preferred_element_type=f32) * mvh

    # ---- all-head scores in ONE matmul: (16,32) x (128,32)^T -> (16,128) ----
    sc = lax.dot_general(q.astype(bf16), k_rows.astype(bf16),
                         (((1,), (1,)), ((), ())),
                         preferred_element_type=f32)               # (16, 128)

    # ---- block softmax: exp, 0/1 mask multiply, segment-sum matmul ----
    allowed = a_ref[R_ALLOW:R_ALLOW + BS, 0:WIDE]                  # (16, 128)
    p = jnp.exp(sc) * allowed                                      # f32 EUP
    seg_h = a_ref[R_SEGH:R_SEGH + WIDE, 0:WIDE].astype(bf16)       # (128, 128)
    sums = jnp.dot(p.astype(bf16), seg_h, preferred_element_type=f32)
    p = p * pl.reciprocal(sums, approx=True)

    # ---- context + output projection ----
    ctx = jnp.dot(p.astype(bf16), v_rows.astype(bf16),
                  preferred_element_type=f32)                      # (16, 32)
    opw = a_ref[R_OPW:R_OPW + H, 0:H].astype(bf16)
    op_b = a_ref[R_VEC + 3:R_VEC + 4, 0:H]
    attn = jnp.dot(ctx.astype(bf16), opw,
                   preferred_element_type=f32) + op_b              # (16, 32)

    # ---- attention_fc: Linear(H,128) -> Tanh -> Linear(128,1) -> Sigmoid ----
    f1w = a_ref[R_F1W:R_F1W + H, :].astype(bf16)                   # (32, 128)
    f1_b = a_ref[R_VEC + 4:R_VEC + 5, :]
    y = jnp.tanh(jnp.dot(attn.astype(bf16), f1w,
                         preferred_element_type=f32) + f1_b)       # (16, 128)
    f2_w = a_ref[R_VEC + 5:R_VEC + 6, :]
    f2_b = a_ref[R_VEC + 6:R_VEC + 7, 0:1]
    wl = jnp.sum(y * f2_w, axis=-1, keepdims=True) + f2_b          # (16, 1)
    mcol = a_ref[R_MCOL:R_MCOL + BS, 0:1]
    w = jax.nn.sigmoid(wl) * mcol                                  # (16, 1)

    # ---- masked weighted pooling per batch (tiny f32 segment matmuls) ----
    seg = a_ref[R_SEGP:R_SEGP + B, 0:BS]                           # (2, 16)
    pooled_num = jnp.dot(seg, w * attn, preferred_element_type=f32)  # (2, 32)
    w_sum = jnp.dot(seg, w, preferred_element_type=f32)              # (2, 1)
    pooled = pooled_num * pl.reciprocal(w_sum + 1e-9, approx=True)

    # ---- classifier: Linear(H,256) -> ReLU -> Linear(256,4) ----
    c1w = b_ref[RB_C1W:RB_C1W + H, :].astype(bf16)                 # (32, 256)
    c1b = b_ref[RB_C1B:RB_C1B + 1, :]
    z = jnp.maximum(jnp.dot(pooled.astype(bf16), c1w,
                            preferred_element_type=f32) + c1b, 0.0)  # (2, 256)
    c2w = b_ref[RB_C2W:RB_C2W + OUTW, :].astype(bf16)              # (8, 256)
    c2b = a_ref[R_VEC + 7:R_VEC + 8, 0:OUTW]                       # (1, 8)
    out = lax.dot_general(z.astype(bf16), c2w, (((1,), (1,)), ((), ())),
                          preferred_element_type=f32) + c2b        # (2, 8)
    out_ref[...] = out


def pack_operands(hidden_states, attention_mask, params):
    """Host-side layout plumbing: pre-transpose weights, build constant masks,
    and pack EVERYTHING into two lane-dense f32 slabs (2 DMAs total)."""
    f32 = jnp.float32
    hflat = hidden_states.reshape(BS, H).astype(f32)
    mask_flat = attention_mask.reshape(BS).astype(f32)

    # trace-free constant matrices
    m_idx = np.arange(WIDE)
    s_idx = np.arange(BS)
    d_idx = np.arange(H)
    eht = (m_idx[:, None] % BS == s_idx[None, :]).astype(np.float32)       # (128,16)
    mvh = ((m_idx[:, None] // BS) == (d_idx[None, :] // HEAD_DIM)).astype(np.float32)
    seg_head = ((m_idx[:, None] // BS) == (m_idx[None, :] // BS)).astype(np.float32)
    seg_pool = (np.arange(B)[:, None] == (s_idx[None, :] // S)).astype(np.float32)
    same_b = ((s_idx[:, None] // S) == (s_idx[None, :] // S)).astype(np.float32)

    # data-dependent key mask, pre-expanded to the head-major (16, 128) layout
    allowed_small = same_b * (mask_flat[None, :] > 0).astype(f32)          # (16, 16)
    allowed_big = jnp.tile(allowed_small, (1, NUM_HEADS))                  # (16, 128)

    ipw = params["in_proj_w"]                    # (3H, H) torch layout
    ipb = params["in_proj_b"][0]                 # (3H,)
    w_qkv = ipw.T                                # (H, 3H) fused QKV weight
    opw_t = params["out_proj_w"].T               # (H, H)
    f1w_t = params["fc1_w"].T                    # (H, 128)
    c1w_t = params["c1_w"].T                     # (H, 256)

    a = jnp.zeros((ROWS_A, 128), f32)
    a = a.at[R_H:R_H + BS, :H].set(hflat)
    a = a.at[R_WQKV:R_WQKV + H, :3 * H].set(w_qkv)
    a = a.at[R_OPW:R_OPW + H, :H].set(opw_t)
    a = a.at[R_F1W:R_F1W + H, :].set(f1w_t)
    a = a.at[R_EHT:R_EHT + WIDE, :BS].set(jnp.asarray(eht))
    a = a.at[R_MVH:R_MVH + WIDE, :H].set(jnp.asarray(mvh))
    a = a.at[R_ALLOW:R_ALLOW + BS, :WIDE].set(allowed_big)
    a = a.at[R_SEGH:R_SEGH + WIDE, :WIDE].set(jnp.asarray(seg_head))
    a = a.at[R_SEGP:R_SEGP + B, :BS].set(jnp.asarray(seg_pool))
    a = a.at[R_MCOL:R_MCOL + BS, 0].set(mask_flat)
    a = a.at[R_VEC + 0, :H].set(params["ln_g"][0])
    a = a.at[R_VEC + 1, :H].set(params["ln_b"][0])
    a = a.at[R_VEC + 2, :3 * H].set(ipb)
    a = a.at[R_VEC + 3, :H].set(params["out_proj_b"][0])
    a = a.at[R_VEC + 4, :].set(params["fc1_b"][0])
    a = a.at[R_VEC + 5, :].set(params["fc2_w"][0])
    a = a.at[R_VEC + 6, 0].set(params["fc2_b"][0, 0])
    a = a.at[R_VEC + 7, :NUM_LABELS].set(params["c2_b"][0])

    b = jnp.zeros((ROWS_B, 256), f32)
    b = b.at[RB_C1W:RB_C1W + H, :].set(c1w_t)
    b = b.at[RB_C1B, :].set(params["c1_b"][0])
    b = b.at[RB_C2W:RB_C2W + NUM_LABELS, :].set(params["c2_w"])
    return a, b


def run_pallas(hidden_states, attention_mask, params):
    slab_a, slab_b = pack_operands(hidden_states, attention_mask, params)
    out = pl.pallas_call(
        model_kernel,
        out_shape=jax.ShapeDtypeStruct((B, OUTW), jnp.float32),
        # no grid: whole problem (<0.5 MiB of operands) in one invocation;
        # both slabs are whole-array VMEM blocks -> exactly 2 input DMAs.
    )(slab_a, slab_b)
    return out[:, :NUM_LABELS]


def run_reference(hidden_states, attention_mask, params):
    """Pure-JAX f32 reference of the same forward pass (for validation)."""
    mask = attention_mask.astype(jnp.float32)                        # (B, S)
    h = hidden_states
    mu = jnp.mean(h, axis=-1, keepdims=True)
    var = jnp.mean((h - mu) ** 2, axis=-1, keepdims=True)
    hn = (h - mu) * lax.rsqrt(var + LN_EPS) * params["ln_g"][0] + params["ln_b"][0]

    qkv = hn @ params["in_proj_w"].T + params["in_proj_b"][0]
    q, k, v = qkv[..., :H], qkv[..., H:2 * H], qkv[..., 2 * H:]
    qh = q.reshape(B, S, NUM_HEADS, HEAD_DIM).transpose(0, 2, 1, 3)
    kh = k.reshape(B, S, NUM_HEADS, HEAD_DIM).transpose(0, 2, 1, 3)
    vh = v.reshape(B, S, NUM_HEADS, HEAD_DIM).transpose(0, 2, 1, 3)
    sc = jnp.einsum("bhqd,bhkd->bhqk", qh, kh) / math.sqrt(HEAD_DIM)
    sc = jnp.where((mask > 0)[:, None, None, :], sc, -1e30)
    p = jax.nn.softmax(sc, axis=-1)
    attn = jnp.einsum("bhqk,bhkd->bhqd", p, vh).transpose(0, 2, 1, 3).reshape(B, S, H)
    attn = attn @ params["out_proj_w"].T + params["out_proj_b"][0]

    y = jnp.tanh(attn @ params["fc1_w"].T + params["fc1_b"][0])
    w = jax.nn.sigmoid(y @ params["fc2_w"].T + params["fc2_b"][0])
    w = w * mask[..., None]
    w = w / (jnp.sum(w, axis=1, keepdims=True) + 1e-9)
    pooled = jnp.sum(w * attn, axis=1)                               # (B, H)

    z = jnp.maximum(pooled @ params["c1_w"].T + params["c1_b"][0], 0.0)
    return z @ params["c2_w"].T + params["c2_b"][0]


def make_params(key):
    ks = jax.random.split(key, 16)
    r = lambda k, shape, s=0.1: (s * jax.random.normal(k, shape)).astype(jnp.float32)
    return {
        # LayerNorm (torch default init: gamma=1, beta=0)
        "ln_g": jnp.ones((1, H), jnp.float32),
        "ln_b": jnp.zeros((1, H), jnp.float32),
        # nn.MultiheadAttention (torch (out, in) layout)
        "in_proj_w": r(ks[0], (3 * H, H)),
        "in_proj_b": r(ks[1], (1, 3 * H)),
        "out_proj_w": r(ks[2], (H, H)),
        "out_proj_b": r(ks[3], (1, H)),
        # attention_fc
        "fc1_w": r(ks[4], (128, H)),
        "fc1_b": r(ks[5], (1, 128)),
        "fc2_w": r(ks[6], (1, 128)),
        "fc2_b": r(ks[7], (1, 1)),
        # classifier
        "c1_w": r(ks[8], (256, H)),
        "c1_b": r(ks[9], (1, 256)),
        "c2_w": r(ks[10], (NUM_LABELS, 256)),
        "c2_b": r(ks[11], (1, NUM_LABELS)),
        # deterministic BERT stand-in embedding
        "embed": r(ks[12], (VOCAB, H), s=1.0),
    }


if __name__ == "__main__":
    key = jax.random.PRNGKey(0)
    params = make_params(key)

    kid, _ = jax.random.split(key)
    input_ids = jax.random.randint(kid, (B, S), 0, VOCAB)
    attention_mask = jnp.array(
        [[1, 1, 1, 1, 1, 1, 1, 1],
         [1, 1, 1, 1, 1, 1, 0, 0]], dtype=jnp.float32)

    # "BERT" stub: deterministic embedding lookup producing last_hidden_state
    hidden_states = params["embed"][input_ids].astype(jnp.float32)   # (B, S, H)

    logits = jax.block_until_ready(run_pallas(hidden_states, attention_mask, params))
    ref = jax.block_until_ready(run_reference(hidden_states, attention_mask, params))

    assert logits.shape == (B, NUM_LABELS)
    # Tolerance accounts for bf16 MXU operands (f32 accumulation) and
    # pl.reciprocal(approx=True) in softmax / pooling normalization.
    np.testing.assert_allclose(np.asarray(logits), np.asarray(ref),
                               rtol=5e-2, atol=5e-2)
    print("KERNEL_OK")
</pallas_src>

<mosaic_0001>
module attributes {stable_mosaic.version = 11 : i64} {
  func.func @model_kernel(%arg0: memref<544x128xf32, #tpu.memory_space<vmem>>, %arg1: memref<48x256xf32, #tpu.memory_space<vmem>>, %arg2: memref<2x8xf32, #tpu.memory_space<vmem>>) attributes {dimension_semantics = [], scalar_prefetch = 0 : i64, scratch_operands = 0 : i64, tpu.core_type = #tpu.core_type<tc>} {
    %c0 = arith.constant 0 : index
    %c0_0 = arith.constant 0 : index
    %0 = vector.load %arg0[%c0, %c0_0] : memref<544x128xf32, #tpu.memory_space<vmem>>, vector<16x32xf32>
    %c536 = arith.constant 536 : index
    %c0_1 = arith.constant 0 : index
    %1 = vector.load %arg0[%c536, %c0_1] : memref<544x128xf32, #tpu.memory_space<vmem>>, vector<1x32xf32>
    %c537 = arith.constant 537 : index
    %c0_2 = arith.constant 0 : index
    %2 = vector.load %arg0[%c537, %c0_2] : memref<544x128xf32, #tpu.memory_space<vmem>>, vector<1x32xf32>
    %cst = arith.constant dense<0.000000e+00> : vector<16xf32>
    %3 = vector.multi_reduction <add>, %0, %cst [1] : vector<16x32xf32> to vector<16xf32>
    %4 = vector.shape_cast %3 : vector<16xf32> to vector<16x1xf32>
    %cst_3 = arith.constant 3.200000e+01 : f32
    %5 = vector.broadcast %cst_3 : f32 to vector<16x1xf32>
    %6 = arith.divf %4, %5 : vector<16x1xf32>
    %7 = arith.mulf %0, %0 : vector<16x32xf32>
    %cst_4 = arith.constant dense<0.000000e+00> : vector<16xf32>
    %8 = vector.multi_reduction <add>, %7, %cst_4 [1] : vector<16x32xf32> to vector<16xf32>
    %9 = vector.shape_cast %8 : vector<16xf32> to vector<16x1xf32>
    %cst_5 = arith.constant 3.200000e+01 : f32
    %10 = vector.broadcast %cst_5 : f32 to vector<16x1xf32>
    %11 = arith.divf %9, %10 : vector<16x1xf32>
    %12 = arith.mulf %6, %6 : vector<16x1xf32>
    %13 = arith.subf %11, %12 : vector<16x1xf32>
    %14 = vector.broadcast %6 : vector<16x1xf32> to vector<16x32xf32>
    %15 = arith.subf %0, %14 : vector<16x32xf32>
    %cst_6 = arith.constant 9.99999974E-6 : f32
    %16 = vector.broadcast %cst_6 : f32 to vector<16x1xf32>
    %17 = arith.addf %13, %16 : vector<16x1xf32>
    %18 = math.rsqrt %17 : vector<16x1xf32>
    %19 = vector.broadcast %18 : vector<16x1xf32> to vector<16x32xf32>
    %20 = arith.mulf %15, %19 : vector<16x32xf32>
    %21 = vector.broadcast %1 : vector<1x32xf32> to vector<16x32xf32>
    %22 = arith.mulf %20, %21 : vector<16x32xf32>
    %23 = vector.broadcast %2 : vector<1x32xf32> to vector<16x32xf32>
    %24 = arith.addf %22, %23 : vector<16x32xf32>
    %c16 = arith.constant 16 : index
    %c0_7 = arith.constant 0 : index
    %25 = vector.load %arg0[%c16, %c0_7] : memref<544x128xf32, #tpu.memory_space<vmem>>, vector<32x96xf32>
    %26 = arith.truncf %25 : vector<32x96xf32> to vector<32x96xbf16>
    %c538 = arith.constant 538 : index
    %c0_8 = arith.constant 0 : index
    %27 = vector.load %arg0[%c538, %c0_8] : memref<544x128xf32, #tpu.memory_space<vmem>>, vector<1x96xf32>
    %28 = arith.truncf %24 : vector<16x32xf32> to vector<16x32xbf16>
    %cst_9 = arith.constant dense<0.000000e+00> : vector<16x96xf32>
    %29 = tpu.matmul %28, %26, %cst_9 {dimension_numbers = #tpu.dot_dimension_numbers<[1], [0], [0], [1], [0, 0, 1, 1], [], []>} : vector<16x32xbf16>, vector<32x96xbf16>, vector<16x96xf32> -> vector<16x96xf32>
    %30 = vector.broadcast %27 : vector<1x96xf32> to vector<16x96xf32>
    %31 = arith.addf %29, %30 : vector<16x96xf32>
    %32 = vector.extract_strided_slice %31 {offsets = [0, 0], sizes = [16, 32], strides = [1, 1]} : vector<16x96xf32> to vector<16x32xf32>
    %cst_10 = arith.constant 5.000000e-01 : f32
    %33 = vector.broadcast %cst_10 : f32 to vector<16x32xf32>
    %34 = arith.mulf %32, %33 : vector<16x32xf32>
    %35 = vector.extract_strided_slice %31 {offsets = [0, 32], sizes = [16, 32], strides = [1, 1]} : vector<16x96xf32> to vector<16x32xf32>
    %36 = vector.extract_strided_slice %31 {offsets = [0, 64], sizes = [16, 32], strides = [1, 1]} : vector<16x96xf32> to vector<16x32xf32>
    %c112 = arith.constant 112 : index
    %c0_11 = arith.constant 0 : index
    %37 = vector.load %arg0[%c112, %c0_11] : memref<544x128xf32, #tpu.memory_space<vmem>>, vector<128x16xf32>
    %38 = arith.truncf %37 : vector<128x16xf32> to vector<128x16xbf16>
    %c240 = arith.constant 240 : index
    %c0_12 = arith.constant 0 : index
    %39 = vector.load %arg0[%c240, %c0_12] : memref<544x128xf32, #tpu.memory_space<vmem>>, vector<128x32xf32>
    %40 = arith.truncf %35 : vector<16x32xf32> to vector<16x32xbf16>
    %cst_13 = arith.constant dense<0.000000e+00> : vector<128x32xf32>
    %41 = tpu.matmul %38, %40, %cst_13 {dimension_numbers = #tpu.dot_dimension_numbers<[1], [0], [0], [1], [0, 0, 1, 1], [], []>} : vector<128x16xbf16>, vector<16x32xbf16>, vector<128x32xf32> -> vector<128x32xf32>
    %42 = arith.mulf %41, %39 : vector<128x32xf32>
    %43 = arith.truncf %36 : vector<16x32xf32> to vector<16x32xbf16>
    %cst_14 = arith.constant dense<0.000000e+00> : vector<128x32xf32>
    %44 = tpu.matmul %38, %43, %cst_14 {dimension_numbers = #tpu.dot_dimension_numbers<[1], [0], [0], [1], [0, 0, 1, 1], [], []>} : vector<128x16xbf16>, vector<16x32xbf16>, vector<128x32xf32> -> vector<128x32xf32>
    %45 = arith.mulf %44, %39 : vector<128x32xf32>
    %46 = arith.truncf %34 : vector<16x32xf32> to vector<16x32xbf16>
    %47 = arith.truncf %42 : vector<128x32xf32> to vector<128x32xbf16>
    %cst_15 = arith.constant dense<0.000000e+00> : vector<16x128xf32>
    %48 = tpu.matmul %46, %47, %cst_15 {dimension_numbers = #tpu.dot_dimension_numbers<[1], [1], [0], [0], [0, 0, 1, 0], [], []>} : vector<16x32xbf16>, vector<128x32xbf16>, vector<16x128xf32> -> vector<16x128xf32>
    %c368 = arith.constant 368 : index
    %c0_16 = arith.constant 0 : index
    %49 = vector.load %arg0[%c368, %c0_16] : memref<544x128xf32, #tpu.memory_space<vmem>>, vector<16x128xf32>
    %50 = math.exp %48 : vector<16x128xf32>
    %51 = arith.mulf %50, %49 : vector<16x128xf32>
    %c384 = arith.constant 384 : index
    %c0_17 = arith.constant 0 : index
    %52 = vector.load %arg0[%c384, %c0_17] : memref<544x128xf32, #tpu.memory_space<vmem>>, vector<128x128xf32>
    %53 = arith.truncf %52 : vector<128x128xf32> to vector<128x128xbf16>
    %54 = arith.truncf %51 : vector<16x128xf32> to vector<16x128xbf16>
    %cst_18 = arith.constant dense<0.000000e+00> : vector<16x128xf32>
    %55 = tpu.matmul %54, %53, %cst_18 {dimension_numbers = #tpu.dot_dimension_numbers<[1], [0], [0], [1], [0, 0, 1, 1], [], []>} : vector<16x128xbf16>, vector<128x128xbf16>, vector<16x128xf32> -> vector<16x128xf32>
    %56 = tpu.reciprocal %55 {approx = true} : vector<16x128xf32> -> vector<16x128xf32>
    %57 = arith.mulf %51, %56 : vector<16x128xf32>
    %58 = arith.truncf %57 : vector<16x128xf32> to vector<16x128xbf16>
    %59 = arith.truncf %45 : vector<128x32xf32> to vector<128x32xbf16>
    %cst_19 = arith.constant dense<0.000000e+00> : vector<16x32xf32>
    %60 = tpu.matmul %58, %59, %cst_19 {dimension_numbers = #tpu.dot_dimension_numbers<[1], [0], [0], [1], [0, 0, 1, 1], [], []>} : vector<16x128xbf16>, vector<128x32xbf16>, vector<16x32xf32> -> vector<16x32xf32>
    %c48 = arith.constant 48 : index
    %c0_20 = arith.constant 0 : index
    %61 = vector.load %arg0[%c48, %c0_20] : memref<544x128xf32, #tpu.memory_space<vmem>>, vector<32x32xf32>
    %62 = arith.truncf %61 : vector<32x32xf32> to vector<32x32xbf16>
    %c539 = arith.constant 539 : index
    %c0_21 = arith.constant 0 : index
    %63 = vector.load %arg0[%c539, %c0_21] : memref<544x128xf32, #tpu.memory_space<vmem>>, vector<1x32xf32>
    %64 = arith.truncf %60 : vector<16x32xf32> to vector<16x32xbf16>
    %cst_22 = arith.constant dense<0.000000e+00> : vector<16x32xf32>
    %65 = tpu.matmul %64, %62, %cst_22 {dimension_numbers = #tpu.dot_dimension_numbers<[1], [0], [0], [1], [0, 0, 1, 1], [], []>} : vector<16x32xbf16>, vector<32x32xbf16>, vector<16x32xf32> -> vector<16x32xf32>
    %66 = vector.broadcast %63 : vector<1x32xf32> to vector<16x32xf32>
    %67 = arith.addf %65, %66 : vector<16x32xf32>
    %c80 = arith.constant 80 : index
    %c0_23 = arith.constant 0 : index
    %68 = vector.load %arg0[%c80, %c0_23] : memref<544x128xf32, #tpu.memory_space<vmem>>, vector<32x128xf32>
    %69 = arith.truncf %68 : vector<32x128xf32> to vector<32x128xbf16>
    %c540 = arith.constant 540 : index
    %c0_24 = arith.constant 0 : index
    %70 = vector.load %arg0[%c540, %c0_24] : memref<544x128xf32, #tpu.memory_space<vmem>>, vector<1x128xf32>
    %71 = arith.truncf %67 : vector<16x32xf32> to vector<16x32xbf16>
    %cst_25 = arith.constant dense<0.000000e+00> : vector<16x128xf32>
    %72 = tpu.matmul %71, %69, %cst_25 {dimension_numbers = #tpu.dot_dimension_numbers<[1], [0], [0], [1], [0, 0, 1, 1], [], []>} : vector<16x32xbf16>, vector<32x128xbf16>, vector<16x128xf32> -> vector<16x128xf32>
    %73 = vector.broadcast %70 : vector<1x128xf32> to vector<16x128xf32>
    %74 = arith.addf %72, %73 : vector<16x128xf32>
    %75 = math.tanh %74 : vector<16x128xf32>
    %c541 = arith.constant 541 : index
    %c0_26 = arith.constant 0 : index
    %76 = vector.load %arg0[%c541, %c0_26] : memref<544x128xf32, #tpu.memory_space<vmem>>, vector<1x128xf32>
    %c542 = arith.constant 542 : index
    %c0_27 = arith.constant 0 : index
    %77 = vector.load %arg0[%c542, %c0_27] : memref<544x128xf32, #tpu.memory_space<vmem>>, vector<1x1xf32>
    %78 = vector.broadcast %76 : vector<1x128xf32> to vector<16x128xf32>
    %79 = arith.mulf %75, %78 : vector<16x128xf32>
    %cst_28 = arith.constant dense<0.000000e+00> : vector<16xf32>
    %80 = vector.multi_reduction <add>, %79, %cst_28 [1] : vector<16x128xf32> to vector<16xf32>
    %81 = vector.shape_cast %80 : vector<16xf32> to vector<16x1xf32>
    %82 = vector.broadcast %77 : vector<1x1xf32> to vector<16x1xf32>
    %83 = arith.addf %81, %82 : vector<16x1xf32>
    %c520 = arith.constant 520 : index
    %c0_29 = arith.constant 0 : index
    %84 = vector.load %arg0[%c520, %c0_29] : memref<544x128xf32, #tpu.memory_space<vmem>>, vector<16x1xf32>
    %85 = arith.negf %83 : vector<16x1xf32>
    %86 = math.exp %85 : vector<16x1xf32>
    %cst_30 = arith.constant 1.000000e+00 : f32
    %87 = vector.broadcast %cst_30 : f32 to vector<16x1xf32>
    %88 = arith.addf %87, %86 : vector<16x1xf32>
    %89 = arith.divf %87, %88 : vector<16x1xf32>
    %90 = arith.mulf %89, %84 : vector<16x1xf32>
    %c512 = arith.constant 512 : index
    %c0_31 = arith.constant 0 : index
    %91 = vector.load %arg0[%c512, %c0_31] : memref<544x128xf32, #tpu.memory_space<vmem>>, vector<2x16xf32>
    %92 = vector.broadcast %90 : vector<16x1xf32> to vector<16x32xf32>
    %93 = arith.mulf %92, %67 : vector<16x32xf32>
    %cst_32 = arith.constant dense<0.000000e+00> : vector<2x32xf32>
    %94 = tpu.matmul %91, %93, %cst_32 {dimension_numbers = #tpu.dot_dimension_numbers<[1], [0], [0], [1], [0, 0, 1, 1], [], []>} : vector<2x16xf32>, vector<16x32xf32>, vector<2x32xf32> -> vector<2x32xf32>
    %cst_33 = arith.constant dense<0.000000e+00> : vector<2x1xf32>
    %95 = tpu.matmul %91, %90, %cst_33 {dimension_numbers = #tpu.dot_dimension_numbers<[1], [0], [0], [1], [0, 0, 1, 1], [], []>} : vector<2x16xf32>, vector<16x1xf32>, vector<2x1xf32> -> vector<2x1xf32>
    %cst_34 = arith.constant 9.99999971E-10 : f32
    %96 = vector.broadcast %cst_34 : f32 to vector<2x1xf32>
    %97 = arith.addf %95, %96 : vector<2x1xf32>
    %98 = tpu.reciprocal %97 {approx = true} : vector<2x1xf32> -> vector<2x1xf32>
    %99 = vector.broadcast %98 : vector<2x1xf32> to vector<2x32xf32>
    %100 = arith.mulf %94, %99 : vector<2x32xf32>
    %c0_35 = arith.constant 0 : index
    %c0_36 = arith.constant 0 : index
    %101 = vector.load %arg1[%c0_35, %c0_36] : memref<48x256xf32, #tpu.memory_space<vmem>>, vector<32x256xf32>
    %102 = arith.truncf %101 : vector<32x256xf32> to vector<32x256xbf16>
    %c32 = arith.constant 32 : index
    %c0_37 = arith.constant 0 : index
    %103 = vector.load %arg1[%c32, %c0_37] : memref<48x256xf32, #tpu.memory_space<vmem>>, vector<1x256xf32>
    %104 = arith.truncf %100 : vector<2x32xf32> to vector<2x32xbf16>
    %cst_38 = arith.constant dense<0.000000e+00> : vector<2x256xf32>
    %105 = tpu.matmul %104, %102, %cst_38 {dimension_numbers = #tpu.dot_dimension_numbers<[1], [0], [0], [1], [0, 0, 1, 1], [], []>} : vector<2x32xbf16>, vector<32x256xbf16>, vector<2x256xf32> -> vector<2x256xf32>
    %106 = vector.broadcast %103 : vector<1x256xf32> to vector<2x256xf32>
    %107 = arith.addf %105, %106 : vector<2x256xf32>
    %cst_39 = arith.constant 0.000000e+00 : f32
    %108 = vector.broadcast %cst_39 : f32 to vector<2x256xf32>
    %109 = arith.maximumf %107, %108 : vector<2x256xf32>
    %c40 = arith.constant 40 : index
    %c0_40 = arith.constant 0 : index
    %110 = vector.load %arg1[%c40, %c0_40] : memref<48x256xf32, #tpu.memory_space<vmem>>, vector<8x256xf32>
    %111 = arith.truncf %110 : vector<8x256xf32> to vector<8x256xbf16>
    %c543 = arith.constant 543 : index
    %c0_41 = arith.constant 0 : index
    %112 = vector.load %arg0[%c543, %c0_41] : memref<544x128xf32, #tpu.memory_space<vmem>>, vector<1x8xf32>
    %113 = arith.truncf %109 : vector<2x256xf32> to vector<2x256xbf16>
    %cst_42 = arith.constant dense<0.000000e+00> : vector<2x8xf32>
    %114 = tpu.matmul %113, %111, %cst_42 {dimension_numbers = #tpu.dot_dimension_numbers<[1], [1], [0], [0], [0, 0, 1, 0], [], []>} : vector<2x256xbf16>, vector<8x256xbf16>, vector<2x8xf32> -> vector<2x8xf32>
    %115 = vector.broadcast %112 : vector<1x8xf32> to vector<2x8xf32>
    %116 = arith.addf %114, %115 : vector<2x8xf32>
    %c0_43 = arith.constant 0 : index
    %c0_44 = arith.constant 0 : index
    %117 = vector.load %arg2[%c0_43, %c0_44] : memref<2x8xf32, #tpu.memory_space<vmem>>, vector<2x8xf32>
    tpu.vector_store %arg2[%c0_43, %c0_44], %116 {strides = array<i32>} : memref<2x8xf32, #tpu.memory_space<vmem>>, vector<2x8xf32>,
    return
  }
}

</mosaic_0001>

<llo_original>
// kernel: tpu_custom_call.1
$region0: #{tpu_custom_call.1}
  #allocation0 [shape = 'u32[]', space=smem, size = 0x4, offset = 0x4, fixed_abs, tag = 'smem constant byte address 0x4 - core index']
  #allocation1 [shape = 'u32[72,128]{1,0:T(1,128)}', space=vmem, size = 0x9000, scoped, tag = 'internal scratch']
  %s0 = inlined_call_operand.hbm [shape: f32[544,128], index: 0, kind: input, shape index: {}]
  %s1 = inlined_call_operand.hbm [shape: f32[48,256], index: 1, kind: input, shape index: {}]
  %s2 = inlined_call_operand.hbm [shape: f32[2,8], index: 2, kind: output, shape index: {}]
  %s3 = sld [smem:[#allocation0]]
  $region26: #{tpu_custom_call.1} parent=0
    _
  %s5 = ssub.s32 1, %s3
  %s6 = scalar_select 0, %s5, %s3
  $region1: #{tpu_custom_call.1} parent=0
    #allocation2 [shape = 'u8[278528]{0}', space=vmem, size = 0x44000, scoped, tag = 'input window, operand 0, single buffered']
    #allocation3 [shape = 's32[1]{0}', space=sflag, size = 0x4, scoped, tag = 'scoped memory for tpu_custom_call.1']
    #allocation4 [shape = 's32[1]{0}', space=sflag, size = 0x4, scoped, tag = 'scoped memory for tpu_custom_call.1']
    #allocation5 [shape = 'u8[49152]{0}', space=vmem, size = 0xc000, scoped, tag = 'input window, operand 1, single buffered']
    #allocation6 [shape = 's32[1]{0}', space=sflag, size = 0x4, scoped, tag = 'scoped memory for tpu_custom_call.1']
    #allocation7 [shape = 'u8[1024]{0}', space=vmem, size = 0x400, scoped, tag = 'output window, operand 0, single buffered']
    %7 = vsyncpa [#allocation3], 0
    %8 = vsyncpa [#allocation6], 0
    %9 = vsyncpa [#allocation4], 0
    // Predicated region
    $region2: #{tpu_custom_call.1} parent=1 // pred_check
      _
    $region3: #{tpu_custom_call.1} parent=1 // pred_check_branch
      %11 = sbr.rel (0) target = $region5
    $region4: #{tpu_custom_call.1} parent=1 // pred_region
      %13 = vsyncadd [#allocation3], 0
      %s14 = sshll.u32 %s0, 4
      %s15 = int_to_ptr.hbm [resolvable:$true] %s14
      %s16 = sshll.u32 [#allocation2], 4
      %s17 = int_to_ptr.vmem [resolvable:$true] %s16
      %22 = dma.hbm_to_vmem [thread:$0]  %s15, 8704, %s17, [#allocation3], 128, 128, 8
    $region5: #{tpu_custom_call.1} parent=1 // pred_fallthru
      _
    // Predicated region
    $region6: #{tpu_custom_call.1} parent=1 // pred_check
      _
    $region7: #{tpu_custom_call.1} parent=1 // pred_check_branch
      %24 = sbr.rel (0) target = $region9
    $region8: #{tpu_custom_call.1} parent=1 // pred_region
      %26 = vsyncadd [#allocation6], 0
      %s27 = sshll.u32 %s1, 4
      %s28 = int_to_ptr.hbm [resolvable:$true] %s27
      %s29 = sshll.u32 [#allocation5], 4
      %s30 = int_to_ptr.vmem [resolvable:$true] %s29
      %35 = dma.hbm_to_vmem [thread:$0]  %s28, 1536, %s30, [#allocation6], 256, 256, 16
    $region9: #{tpu_custom_call.1} parent=1 // pred_fallthru
      _
    // Predicated region
    $region10: #{tpu_custom_call.1} parent=1 // pred_check
      _
    $region11: #{tpu_custom_call.1} parent=1 // pred_check_branch
      %37 = sbr.rel (0) target = $region13
    $region12: #{tpu_custom_call.1} parent=1 // pred_region
      %39 = dma.done [#allocation3], 8704
    $region13: #{tpu_custom_call.1} parent=1 // pred_fallthru
      _
    // Predicated region
    $region14: #{tpu_custom_call.1} parent=1 // pred_check
      _
    $region15: #{tpu_custom_call.1} parent=1 // pred_check_branch
      %41 = sbr.rel (0) target = $region17
    $region16: #{tpu_custom_call.1} parent=1 // pred_region
      %43 = dma.done [#allocation6], 1536
    $region17: #{tpu_custom_call.1} parent=1 // pred_fallthru
      _
    %v45 = vld [vmem:[#allocation2] sm:$0xff]
    %v46 = vld [vmem:[#allocation2 + $0x8] sm:$0xff]
    %v47 = vld [vmem:[#allocation2 + $0x218] sm:$0x1]
    %v48 = vld [vmem:[#allocation2 + $0x219] sm:$0x1]
    %vm49 = vcmask 261120
    %v50 = vsel %vm49, %v45, 0.0
    %51 = vadd.xlane.f32.xlu0 %v50
    %v52 = vpop.xlane.xlu0 %51
    %v53 = vsel %vm49, %v46, 0.0
    %54 = vadd.xlane.f32.xlu0 %v53
    %v55 = vpop.xlane.xlu0 %54
    %v56 = vrcp.pop 32.0
    %v57 = vmul.f32 32.0, %v56
    %v58 = vsub.f32 1.0, %v57
    %v59 = vmul.f32 %v56, %v58
    %v60 = vadd.f32 %v56, %v59
    %vm61 = vweird.f32 %v56
    %v62 = vsel %vm61, %v56, %v60
    %v63 = vmul.f32 %v52, %v62
    %v64 = vmul.f32 %v55, %v62
    %v65 = vmul.f32 %v45, %v45
    %v66 = vmul.f32 %v46, %v46
    %v67 = vsel %vm49, %v65, 0.0
    %68 = vadd.xlane.f32.xlu0 %v67
    %v69 = vpop.xlane.xlu0 %68
    %v70 = vsel %vm49, %v66, 0.0
    %71 = vadd.xlane.f32.xlu0 %v70
    %v72 = vpop.xlane.xlu0 %71
    %v73 = vmul.f32 %v69, %v62
    %v74 = vmul.f32 %v72, %v62
    %v75 = vmul.f32 %v63, %v63
    %v76 = vmul.f32 %v64, %v64
    %v77 = vsub.f32 %v73, %v75
    %v78 = vsub.f32 %v74, %v76
    %v79 = vsub.f32 %v45, %v63
    %v80 = vsub.f32 %v46, %v64
    %v81 = vadd.f32 %v77, 1e-05
    %v82 = vadd.f32 %v78, 1e-05
    %v83 = vrsqrt.pop %v81
    %v84 = vmul.f32 %v83, %v81
    %v85 = vmul.f32 %v84, %v83
    %v86 = vmul.f32 0.5, %v85
    %v87 = vsub.f32 1.5, %v86
    %v88 = vmul.f32 %v83, %v87
    %vm89 = vweird.f32 %v81
    %vm90 = vweird.f32 %v83
    %vm91 = vmor %vm89, %vm90
    %v92 = vsel %vm91, %v83, %v88
    %v93 = vrsqrt.pop %v82
    %v94 = vmul.f32 %v93, %v82
    %v95 = vmul.f32 %v94, %v93
    %v96 = vmul.f32 0.5, %v95
    %v97 = vsub.f32 1.5, %v96
    %v98 = vmul.f32 %v93, %v97
    %vm99 = vweird.f32 %v82
    %vm100 = vweird.f32 %v93
    %vm101 = vmor %vm99, %vm100
    %v102 = vsel %vm101, %v93, %v98
    %v103 = vmul.f32 %v79, %v92
    %v104 = vmul.f32 %v80, %v102
    %v105 = vperm.slane %v47, 0
    %v106 = vmul.f32 %v103, %v105
    %v107 = vmul.f32 %v104, %v105
    %v108 = vperm.slane %v48, 0
    %v109 = vadd.f32 %v106, %v108
    %v110 = vadd.f32 %v107, %v108
    %v111 = vld [vmem:[#allocation2 + $0x10] sm:$0xff]
    %v112 = vld [vmem:[#allocation2 + $0x18] sm:$0xff]
    %v113 = vld [vmem:[#allocation2 + $0x20] sm:$0xff]
    %v114 = vld [vmem:[#allocation2 + $0x28] sm:$0xff]
    %v115 = vpack.c.bf16 %v112, %v111
    %v116 = vpack.c.bf16 %v114, %v113
    %v117 = vld [vmem:[#allocation2 + $0x21a] sm:$0x1]
    %v118 = vpack.c.bf16 %v110, %v109
    %v119 = vperm.slane %v117, 0
    %v121 = vsel %vm49, %v118, 0
    %123 = vmatpush.bf16.msra.mxu0 0
    %124 = vmatpush.bf16.msra.mxu0 0
    %125 = vmatpush.bf16.msra.mxu0 0
    %126 = vmatpush.bf16.msra.mxu0 0
    %127 = vmatpush.bf16.msra.mxu0 0
    %128 = vmatpush.bf16.msra.mxu0 0
    %129 = vmatpush.bf16.msra.mxu0 %v116
    %130 = vmatpush.bf16.msra.mxu0 %v115
    %131 = vmatmul.bf16.gmra.mxu0 %v121
    %v132 = vpop.f32.mrf.mxu0
    %v133 = vadd.f32 %v119, %v132
    %v134 = vpop.f32.mrf.mxu0
    %v135 = vadd.f32 %v119, %v134
    %136 = vdwg.mxu0
    %v137 = vmul.f32 %v133, 0.5
    %v138 = vmul.f32 %v135, 0.5
    %v139 = vld [vmem:[#allocation2 + $0x70] sm:$0xff]
    %v140 = vld [vmem:[#allocation2 + $0x78] sm:$0xff]
    %v141 = vld [vmem:[#allocation2 + $0x80] sm:$0xff]
    %v142 = vld [vmem:[#allocation2 + $0x88] sm:$0xff]
    %v143 = vld [vmem:[#allocation2 + $0x90] sm:$0xff]
    %v144 = vld [vmem:[#allocation2 + $0x98] sm:$0xff]
    %v145 = vld [vmem:[#allocation2 + $0xa0] sm:$0xff]
    %v146 = vld [vmem:[#allocation2 + $0xa8] sm:$0xff]
    %v147 = vld [vmem:[#allocation2 + $0xb0] sm:$0xff]
    %v148 = vld [vmem:[#allocation2 + $0xb8] sm:$0xff]
    %v149 = vld [vmem:[#allocation2 + $0xc0] sm:$0xff]
    %v150 = vld [vmem:[#allocation2 + $0xc8] sm:$0xff]
    %v151 = vld [vmem:[#allocation2 + $0xd0] sm:$0xff]
    %v152 = vld [vmem:[#allocation2 + $0xd8] sm:$0xff]
    %v153 = vld [vmem:[#allocation2 + $0xe0] sm:$0xff]
    %v154 = vld [vmem:[#allocation2 + $0xe8] sm:$0xff]
    %v155 = vpack.c.bf16 %v140, %v139
    %v156 = vpack.c.bf16 %v142, %v141
    %v157 = vpack.c.bf16 %v144, %v143
    %v158 = vpack.c.bf16 %v146, %v145
    %v159 = vpack.c.bf16 %v148, %v147
    %v160 = vpack.c.bf16 %v150, %v149
    %v161 = vpack.c.bf16 %v152, %v151
    %v162 = vpack.c.bf16 %v154, %v153
    %v163 = vld [vmem:[#allocation2 + $0xf0] sm:$0xff]
    %v164 = vld [vmem:[#allocation2 + $0xf8] sm:$0xff]
    %v165 = vld [vmem:[#allocation2 + $0x100] sm:$0xff]
    %v166 = vld [vmem:[#allocation2 + $0x108] sm:$0xff]
    %v167 = vld [vmem:[#allocation2 + $0x110] sm:$0xff]
    %v168 = vld [vmem:[#allocation2 + $0x118] sm:$0xff]
    %v169 = vld [vmem:[#allocation2 + $0x120] sm:$0xff]
    %v170 = vld [vmem:[#allocation2 + $0x128] sm:$0xff]
    %v171 = vld [vmem:[#allocation2 + $0x130] sm:$0xff]
    %v172 = vld [vmem:[#allocation2 + $0x138] sm:$0xff]
    %v173 = vld [vmem:[#allocation2 + $0x140] sm:$0xff]
    %v174 = vld [vmem:[#allocation2 + $0x148] sm:$0xff]
    %v175 = vld [vmem:[#allocation2 + $0x150] sm:$0xff]
    %v176 = vld [vmem:[#allocation2 + $0x158] sm:$0xff]
    %v177 = vld [vmem:[#allocation2 + $0x160] sm:$0xff]
    %v178 = vld [vmem:[#allocation2 + $0x168] sm:$0xff]
    %v179 = vpack.c.bf16 %v135, %v133
    %181 = vrot.lane.b32.xlu0 %v179, 96
    %v182 = vpop.permute.xlu0 %181
    %vm184 = vcmask 130048
    %v186 = vsel %vm184, %v155, 0
    %v189 = vsel %vm184, %v156, 0
    %v192 = vsel %vm184, %v157, 0
    %v195 = vsel %vm184, %v158, 0
    %v198 = vsel %vm184, %v159, 0
    %v201 = vsel %vm184, %v160, 0
    %v204 = vsel %vm184, %v161, 0
    %v207 = vsel %vm184, %v162, 0
    %209 = vmatpush.bf16.msra.mxu0 0
    %210 = vmatpush.bf16.msra.mxu0 0
    %211 = vmatpush.bf16.msra.mxu0 0
    %212 = vmatpush.bf16.msra.mxu0 0
    %213 = vmatpush.bf16.msra.mxu0 0
    %214 = vmatpush.bf16.msra.mxu0 0
    %215 = vmatpush.bf16.msra.mxu0 0
    %216 = vmatpush.bf16.msra.mxu0 %v182
    %217 = vmatmul.bf16.gmra.mxu0 %v186
    %v218 = vpop.f32.mrf.mxu0
    %v219 = vadd.f32 0.0, %v218
    %v220 = vpop.f32.mrf.mxu0
    %v221 = vadd.f32 0.0, %v220
    %222 = vmatmul.bf16.gmra.mxu0 %v189
    %v223 = vpop.f32.mrf.mxu0
    %v224 = vadd.f32 0.0, %v223
    %v225 = vpop.f32.mrf.mxu0
    %v226 = vadd.f32 0.0, %v225
    %227 = vmatmul.bf16.gmra.mxu0 %v192
    %v228 = vpop.f32.mrf.mxu0
    %v229 = vadd.f32 0.0, %v228
    %v230 = vpop.f32.mrf.mxu0
    %v231 = vadd.f32 0.0, %v230
    %232 = vmatmul.bf16.gmra.mxu0 %v195
    %v233 = vpop.f32.mrf.mxu0
    %v234 = vadd.f32 0.0, %v233
    %v235 = vpop.f32.mrf.mxu0
    %v236 = vadd.f32 0.0, %v235
    %237 = vmatmul.bf16.gmra.mxu0 %v198
    %v238 = vpop.f32.mrf.mxu0
    %v239 = vadd.f32 0.0, %v238
    %v240 = vpop.f32.mrf.mxu0
    %v241 = vadd.f32 0.0, %v240
    %242 = vmatmul.bf16.gmra.mxu0 %v201
    %v243 = vpop.f32.mrf.mxu0
    %v244 = vadd.f32 0.0, %v243
    %v245 = vpop.f32.mrf.mxu0
    %v246 = vadd.f32 0.0, %v245
    %247 = vmatmul.bf16.gmra.mxu0 %v204
    %v248 = vpop.f32.mrf.mxu0
    %v249 = vadd.f32 0.0, %v248
    %v250 = vpop.f32.mrf.mxu0
    %v251 = vadd.f32 0.0, %v250
    %252 = vmatmul.bf16.gmra.mxu0 %v207
    %v253 = vpop.f32.mrf.mxu0
    %v254 = vadd.f32 0.0, %v253
    %v255 = vpop.f32.mrf.mxu0
    %v256 = vadd.f32 0.0, %v255
    %257 = vdwg.mxu0
    %v258 = vmul.f32 %v219, %v163
    %v259 = vmul.f32 %v221, %v164
    %v260 = vmul.f32 %v224, %v165
    %v261 = vmul.f32 %v226, %v166
    %v262 = vmul.f32 %v229, %v167
    %v263 = vmul.f32 %v231, %v168
    %v264 = vmul.f32 %v234, %v169
    %v265 = vmul.f32 %v236, %v170
    %v266 = vmul.f32 %v239, %v171
    %v267 = vmul.f32 %v241, %v172
    %v268 = vmul.f32 %v244, %v173
    %v269 = vmul.f32 %v246, %v174
    %v270 = vmul.f32 %v249, %v175
    %v271 = vmul.f32 %v251, %v176
    %v272 = vmul.f32 %v254, %v177
    %v273 = vmul.f32 %v256, %v178
    %274 = vrot.lane.b32.xlu0 %v179, 64
    %v275 = vpop.permute.xlu0 %274
    %277 = vmatpush.bf16.msra.mxu0 0
    %278 = vmatpush.bf16.msra.mxu0 0
    %279 = vmatpush.bf16.msra.mxu0 0
    %280 = vmatpush.bf16.msra.mxu0 0
    %281 = vmatpush.bf16.msra.mxu0 0
    %282 = vmatpush.bf16.msra.mxu0 0
    %283 = vmatpush.bf16.msra.mxu0 0
    %284 = vmatpush.bf16.msra.mxu0 %v275
    %285 = vmatmul.bf16.gmra.mxu0 %v186
    %v286 = vpop.f32.mrf.mxu0
    %v287 = vadd.f32 0.0, %v286
    %v288 = vpop.f32.mrf.mxu0
    %v289 = vadd.f32 0.0, %v288
    %290 = vmatmul.bf16.gmra.mxu0 %v189
    %v291 = vpop.f32.mrf.mxu0
    %v292 = vadd.f32 0.0, %v291
    %v293 = vpop.f32.mrf.mxu0
    %v294 = vadd.f32 0.0, %v293
    %295 = vmatmul.bf16.gmra.mxu0 %v192
    %v296 = vpop.f32.mrf.mxu0
    %v297 = vadd.f32 0.0, %v296
    %v298 = vpop.f32.mrf.mxu0
    %v299 = vadd.f32 0.0, %v298
    %300 = vmatmul.bf16.gmra.mxu0 %v195
    %v301 = vpop.f32.mrf.mxu0
    %v302 = vadd.f32 0.0, %v301
    %v303 = vpop.f32.mrf.mxu0
    %v304 = vadd.f32 0.0, %v303
    %305 = vmatmul.bf16.gmra.mxu0 %v198
    %v306 = vpop.f32.mrf.mxu0
    %v307 = vadd.f32 0.0, %v306
    %v308 = vpop.f32.mrf.mxu0
    %v309 = vadd.f32 0.0, %v308
    %310 = vmatmul.bf16.gmra.mxu0 %v201
    %v311 = vpop.f32.mrf.mxu0
    %v312 = vadd.f32 0.0, %v311
    %v313 = vpop.f32.mrf.mxu0
    %v314 = vadd.f32 0.0, %v313
    %315 = vmatmul.bf16.gmra.mxu0 %v204
    %v316 = vpop.f32.mrf.mxu0
    %v317 = vadd.f32 0.0, %v316
    %v318 = vpop.f32.mrf.mxu0
    %v319 = vadd.f32 0.0, %v318
    %320 = vmatmul.bf16.gmra.mxu0 %v207
    %v321 = vpop.f32.mrf.mxu0
    %v322 = vadd.f32 0.0, %v321
    %v323 = vpop.f32.mrf.mxu0
    %v324 = vadd.f32 0.0, %v323
    %325 = vdwg.mxu0
    %v326 = vmul.f32 %v287, %v163
    %v327 = vmul.f32 %v289, %v164
    %v328 = vmul.f32 %v292, %v165
    %v329 = vmul.f32 %v294, %v166
    %v330 = vmul.f32 %v297, %v167
    %v331 = vmul.f32 %v299, %v168
    %v332 = vmul.f32 %v302, %v169
    %v333 = vmul.f32 %v304, %v170
    %v334 = vmul.f32 %v307, %v171
    %v335 = vmul.f32 %v309, %v172
    %v336 = vmul.f32 %v312, %v173
    %v337 = vmul.f32 %v314, %v174
    %v338 = vmul.f32 %v317, %v175
    %v339 = vmul.f32 %v319, %v176
    %v340 = vmul.f32 %v322, %v177
    %v341 = vmul.f32 %v324, %v178
    %v342 = vpack.c.bf16 %v138, %v137
    %v343 = vpack.c.bf16 %v259, %v258
    %v344 = vpack.c.bf16 %v261, %v260
    %v345 = vpack.c.bf16 %v263, %v262
    %v346 = vpack.c.bf16 %v265, %v264
    %v347 = vpack.c.bf16 %v267, %v266
    %v348 = vpack.c.bf16 %v269, %v268
    %v349 = vpack.c.bf16 %v271, %v270
    %v350 = vpack.c.bf16 %v273, %v272
    %v352 = vsel %vm49, %v342, 0
    %v355 = vsel %vm49, %v343, 0
    %v358 = vsel %vm49, %v344, 0
    %v361 = vsel %vm49, %v345, 0
    %v364 = vsel %vm49, %v346, 0
    %v367 = vsel %vm49, %v347, 0
    %v370 = vsel %vm49, %v348, 0
    %v373 = vsel %vm49, %v349, 0
    %v376 = vsel %vm49, %v350, 0
    %378 = vmatpush.bf16.xpose.msra.mxu0 %v376
    %379 = vmatpush.bf16.xpose.msra.mxu0 %v373
    %380 = vmatpush.bf16.xpose.msra.mxu0 %v370
    %381 = vmatpush.bf16.xpose.msra.mxu0 %v367
    %382 = vmatpush.bf16.xpose.msra.mxu0 %v364
    %383 = vmatpush.bf16.xpose.msra.mxu0 %v361
    %384 = vmatpush.bf16.xpose.msra.mxu0 %v358
    %385 = vmatpush.bf16.xpose.msra.mxu0 %v355
    %386 = vmatmul.bf16.gmra.mxu0 %v352
    %v387 = vpop.f32.mrf.mxu0
    %v388 = vadd.f32 0.0, %v387
    %v389 = vpop.f32.mrf.mxu0
    %v390 = vadd.f32 0.0, %v389
    %391 = vdwg.mxu0
    %v392 = vld [vmem:[#allocation2 + $0x170] sm:$0xff]
    %v393 = vld [vmem:[#allocation2 + $0x178] sm:$0xff]
    %v394 = vmul.f32 %v388, 1.442695
    %v395 = vpow.pop %v394
    %v396 = vmul.f32 %v390, 1.442695
    %v397 = vpow.pop %v396
    %v398 = vmul.f32 %v395, %v392
    %v399 = vmul.f32 %v397, %v393
    %v400 = vld [vmem:[#allocation2 + $0x180] sm:$0xff]
    %v401 = vld [vmem:[#allocation2 + $0x188] sm:$0xff]
    %v402 = vld [vmem:[#allocation2 + $0x190] sm:$0xff]
    %v403 = vld [vmem:[#allocation2 + $0x198] sm:$0xff]
    %v404 = vld [vmem:[#allocation2 + $0x1a0] sm:$0xff]
    %v405 = vld [vmem:[#allocation2 + $0x1a8] sm:$0xff]
    %v406 = vld [vmem:[#allocation2 + $0x1b0] sm:$0xff]
    %v407 = vld [vmem:[#allocation2 + $0x1b8] sm:$0xff]
    %v408 = vld [vmem:[#allocation2 + $0x1c0] sm:$0xff]
    %v409 = vld [vmem:[#allocation2 + $0x1c8] sm:$0xff]
    %v410 = vld [vmem:[#allocation2 + $0x1d0] sm:$0xff]
    %v411 = vld [vmem:[#allocation2 + $0x1d8] sm:$0xff]
    %v412 = vld [vmem:[#allocation2 + $0x1e0] sm:$0xff]
    %v413 = vld [vmem:[#allocation2 + $0x1e8] sm:$0xff]
    %v414 = vld [vmem:[#allocation2 + $0x1f0] sm:$0xff]
    %v415 = vld [vmem:[#allocation2 + $0x1f8] sm:$0xff]
    %v416 = vpack.c.bf16 %v401, %v400
    %v417 = vpack.c.bf16 %v403, %v402
    %v418 = vpack.c.bf16 %v405, %v404
    %v419 = vpack.c.bf16 %v407, %v406
    %v420 = vpack.c.bf16 %v409, %v408
    %v421 = vpack.c.bf16 %v411, %v410
    %v422 = vpack.c.bf16 %v413, %v412
    %v423 = vpack.c.bf16 %v415, %v414
    %v424 = vpack.c.bf16 %v399, %v398
    %425 = vmatpush.bf16.msra.mxu0 %v423
    %426 = vmatpush.bf16.msra.mxu0 %v422
    %427 = vmatpush.bf16.msra.mxu0 %v421
    %428 = vmatpush.bf16.msra.mxu0 %v420
    %429 = vmatpush.bf16.msra.mxu0 %v419
    %430 = vmatpush.bf16.msra.mxu0 %v418
    %431 = vmatpush.bf16.msra.mxu0 %v417
    %432 = vmatpush.bf16.msra.mxu0 %v416
    %433 = vmatmul.bf16.gmra.mxu0 %v424
    %v434 = vpop.f32.mrf.mxu0
    %v435 = vadd.f32 0.0, %v434
    %v436 = vpop.f32.mrf.mxu0
    %v437 = vadd.f32 0.0, %v436
    %438 = vdwg.mxu0
    %v439 = vrcp.pop %v435
    %v440 = vrcp.pop %v437
    %v441 = vmul.f32 %v398, %v439
    %v442 = vmul.f32 %v399, %v440
    %v443 = vpack.c.bf16 %v442, %v441
    %v444 = vpack.c.bf16 %v327, %v326
    %v445 = vpack.c.bf16 %v329, %v328
    %v446 = vpack.c.bf16 %v331, %v330
    %v447 = vpack.c.bf16 %v333, %v332
    %v448 = vpack.c.bf16 %v335, %v334
    %v449 = vpack.c.bf16 %v337, %v336
    %v450 = vpack.c.bf16 %v339, %v338
    %v451 = vpack.c.bf16 %v341, %v340
    %452 = vmatpush.bf16.msra.mxu0 %v451
    %453 = vmatpush.bf16.msra.mxu0 %v450
    %454 = vmatpush.bf16.msra.mxu0 %v449
    %455 = vmatpush.bf16.msra.mxu0 %v448
    %456 = vmatpush.bf16.msra.mxu0 %v447
    %457 = vmatpush.bf16.msra.mxu0 %v446
    %458 = vmatpush.bf16.msra.mxu0 %v445
    %459 = vmatpush.bf16.msra.mxu0 %v444
    %460 = vmatmul.bf16.gmra.mxu0 %v443
    %v461 = vpop.f32.mrf.mxu0
    %v462 = vadd.f32 0.0, %v461
    %v463 = vpop.f32.mrf.mxu0
    %v464 = vadd.f32 0.0, %v463
    %465 = vdwg.mxu0
    %v466 = vld [vmem:[#allocation2 + $0x30] sm:$0xff]
    %v467 = vld [vmem:[#allocation2 + $0x38] sm:$0xff]
    %v468 = vld [vmem:[#allocation2 + $0x40] sm:$0xff]
    %v469 = vld [vmem:[#allocation2 + $0x48] sm:$0xff]
    %v470 = vpack.c.bf16 %v467, %v466
    %v471 = vpack.c.bf16 %v469, %v468
    %v472 = vld [vmem:[#allocation2 + $0x21b] sm:$0x1]
    %v473 = vpack.c.bf16 %v464, %v462
    %v474 = vperm.slane %v472, 0
    %v476 = vsel %vm49, %v473, 0
    %478 = vmatpush.bf16.msra.mxu0 0
    %479 = vmatpush.bf16.msra.mxu0 0
    %480 = vmatpush.bf16.msra.mxu0 0
    %481 = vmatpush.bf16.msra.mxu0 0
    %482 = vmatpush.bf16.msra.mxu0 0
    %483 = vmatpush.bf16.msra.mxu0 0
    %484 = vmatpush.bf16.msra.mxu0 %v471
    %485 = vmatpush.bf16.msra.mxu0 %v470
    %486 = vmatmul.bf16.gmra.mxu0 %v476
    %v487 = vpop.f32.mrf.mxu0
    %v488 = vadd.f32 %v474, %v487
    %v489 = vpop.f32.mrf.mxu0
    %v490 = vadd.f32 %v474, %v489
    %491 = vdwg.mxu0
    %v492 = vld [vmem:[#allocation2 + $0x50] sm:$0xff]
    %v493 = vld [vmem:[#allocation2 + $0x58] sm:$0xff]
    %v494 = vld [vmem:[#allocation2 + $0x60] sm:$0xff]
    %v495 = vld [vmem:[#allocation2 + $0x68] sm:$0xff]
    %v496 = vpack.c.bf16 %v493, %v492
    %v497 = vpack.c.bf16 %v495, %v494
    %v498 = vld [vmem:[#allocation2 + $0x21c] sm:$0x1]
    %v499 = vpack.c.bf16 %v490, %v488
    %v500 = vperm.slane %v498, 0
    %v502 = vsel %vm49, %v499, 0
    %504 = vmatpush.bf16.msra.mxu0 0
    %505 = vmatpush.bf16.msra.mxu0 0
    %506 = vmatpush.bf16.msra.mxu0 0
    %507 = vmatpush.bf16.msra.mxu0 0
    %508 = vmatpush.bf16.msra.mxu0 0
    %509 = vmatpush.bf16.msra.mxu0 0
    %510 = vmatpush.bf16.msra.mxu0 %v497
    %511 = vmatpush.bf16.msra.mxu0 %v496
    %512 = vmatmul.bf16.gmra.mxu0 %v502
    %v513 = vpop.f32.mrf.mxu0
    %v514 = vadd.f32 %v500, %v513
    %v515 = vpop.f32.mrf.mxu0
    %v516 = vadd.f32 %v500, %v515
    %517 = vdwg.mxu0
    %v518 = vtanh.pop %v514
    %v519 = vtanh.pop %v516
    %v520 = vld [vmem:[#allocation2 + $0x21d] sm:$0x1]
    %v521 = vld [vmem:[#allocation2 + $0x21e] sm:$0x1]
    %v522 = vperm.slane %v520, 0
    %v523 = vmul.f32 %v518, %v522
    %v524 = vmul.f32 %v519, %v522
    %525 = vadd.xlane.f32.xlu0 %v523
    %v526 = vpop.xlane.xlu0 %525
    %527 = vadd.xlane.f32.xlu0 %v524
    %v528 = vpop.xlane.xlu0 %527
    %v529 = vperm.slane %v521, 0
    %v530 = vadd.f32 %v526, %v529
    %v531 = vadd.f32 %v528, %v529
    %v532 = vld [vmem:[#allocation2 + $0x208] sm:$0xff]
    %v533 = vld [vmem:[#allocation2 + $0x210] sm:$0xff]
    %v534 = vxor.u32 %v530, 2147483648
    %v535 = vxor.u32 %v531, 2147483648
    %v536 = vmul.f32 %v534, 1.442695
    %v537 = vpow.pop %v536
    %v538 = vmul.f32 %v535, 1.442695
    %v539 = vpow.pop %v538
    %v540 = vadd.f32 %v537, 1.0
    %v541 = vadd.f32 %v539, 1.0
    %v542 = vrcp.pop %v540
    %v543 = vmul.f32 %v540, %v542
    %v544 = vsub.f32 1.0, %v543
    %v545 = vmul.f32 %v542, %v544
    %v546 = vadd.f32 %v542, %v545
    %vm547 = vweird.f32 %v540
    %vm548 = vweird.f32 %v542
    %vm549 = vmor %vm547, %vm548
    %v550 = vsel %vm549, %v542, %v546
    %v551 = vand.u32 2147483647, %v540
    %vm552 = vcmp.eq.f32.partialorder %v551, 8.507059e+37
    %v553 = vand.u32 %v540, 2147483648
    %v554 = vor.u32 1.1754944e-38, %v553
    %v555 = vsel %vm552, %v554, %v550
    %v556 = vmul.f32 1.0, %v555
    %v557 = vrcp.pop %v541
    %v558 = vmul.f32 %v541, %v557
    %v559 = vsub.f32 1.0, %v558
    %v560 = vmul.f32 %v557, %v559
    %v561 = vadd.f32 %v557, %v560
    %vm562 = vweird.f32 %v541
    %vm563 = vweird.f32 %v557
    %vm564 = vmor %vm562, %vm563
    %v565 = vsel %vm564, %v557, %v561
    %v566 = vand.u32 2147483647, %v541
    %vm567 = vcmp.eq.f32.partialorder %v566, 8.507059e+37
    %v568 = vand.u32 %v541, 2147483648
    %v569 = vor.u32 1.1754944e-38, %v568
    %v570 = vsel %vm567, %v569, %v565
    %v571 = vmul.f32 1.0, %v570
    %v572 = vmul.f32 %v556, %v532
    %v573 = vmul.f32 %v571, %v533
    %v574 = vld [vmem:[#allocation2 + $0x200] sm:$0x3]
    %576 = vset.pattern.permute.xlu0 0
    %577 = vperm.xlu0 %576, %v572
    %v578 = vpop.permute.xlu0 %577
    %581 = vset.pattern.permute.xlu0 0
    %582 = vperm.xlu0 %581, %v573
    %v583 = vpop.permute.xlu0 %582
    %v585 = vmul.f32 %v578, %v488
    %v586 = vmul.f32 %v583, %v490
    %v588 = vsel %vm184, %v574, 0
    %590 = vmatpush.msra.mxu0 0.0
    %591 = vmatpush.msra.mxu0 0.0
    %592 = vmatpush.msra.mxu0 0.0
    %593 = vmatpush.msra.mxu0 0.0
    %594 = vmatpush.msra.mxu0 0.0
    %595 = vmatpush.msra.mxu0 0.0
    %596 = vmatpush.msra.mxu0 0.0
    %597 = vmatpush.msra.mxu0 0.0
    %598 = vmatpush.msra.mxu0 0.0
    %599 = vmatpush.msra.mxu0 0.0
    %600 = vmatpush.msra.mxu0 0.0
    %601 = vmatpush.msra.mxu0 0.0
    %602 = vmatpush.msra.mxu0 0.0
    %603 = vmatpush.msra.mxu0 0.0
    %604 = vmatpush.msra.mxu0 %v586
    %605 = vmatpush.msra.mxu0 %v585
    %606 = vmatmul.f32.gmra.mxu0 %v588
    %v607 = vpop.f32.mrf.mxu0
    %v608 = vadd.f32 0.0, %v607
    %609 = vdwg.mxu0
    %610 = vmatpush.msra.mxu0 0.0
    %611 = vmatpush.msra.mxu0 0.0
    %612 = vmatpush.msra.mxu0 0.0
    %613 = vmatpush.msra.mxu0 0.0
    %614 = vmatpush.msra.mxu0 0.0
    %615 = vmatpush.msra.mxu0 0.0
    %616 = vmatpush.msra.mxu0 0.0
    %617 = vmatpush.msra.mxu0 0.0
    %618 = vmatpush.msra.mxu0 0.0
    %619 = vmatpush.msra.mxu0 0.0
    %620 = vmatpush.msra.mxu0 0.0
    %621 = vmatpush.msra.mxu0 0.0
    %622 = vmatpush.msra.mxu0 0.0
    %623 = vmatpush.msra.mxu0 0.0
    %624 = vmatpush.msra.mxu0 %v573
    %625 = vmatpush.msra.mxu0 %v572
    %626 = vmatmul.f32.gmra.mxu0 %v588
    %v627 = vpop.f32.mrf.mxu0
    %v628 = vadd.f32 1e-09, %v627
    %629 = vdwg.mxu0
    %v630 = vrcp.pop %v628
    %632 = vset.pattern.permute.xlu0 0
    %633 = vperm.xlu0 %632, %v630
    %v634 = vpop.permute.xlu0 %633
    %v636 = vmul.f32 %v608, %v634
    %v637 = vld [vmem:[#allocation5] sm:$0xff]
    %v638 = vld [vmem:[#allocation5 + $0x8] sm:$0xff]
    %v639 = vld [vmem:[#allocation5 + $0x10] sm:$0xff]
    %v640 = vld [vmem:[#allocation5 + $0x18] sm:$0xff]
    %v641 = vld [vmem:[#allocation5 + $0x20] sm:$0xff]
    %v642 = vld [vmem:[#allocation5 + $0x28] sm:$0xff]
    %v643 = vld [vmem:[#allocation5 + $0x30] sm:$0xff]
    %v644 = vld [vmem:[#allocation5 + $0x38] sm:$0xff]
    %v645 = vpack.c.bf16 %v639, %v637
    %v646 = vpack.c.bf16 %v640, %v638
    %v647 = vpack.c.bf16 %v643, %v641
    %v648 = vpack.c.bf16 %v644, %v642
    %s649 = scalar_lea.vmem [#allocation5], 64
    %v650 = vld [vmem:[%s649] ss:$8 sm:$0x3]
    %v651 = vpack.c.bf16 %v636, %v636
    %v653 = vperm.slane %v650, 0
    %v654 = vperm.slane %v650, 1
    %v658 = vsel %vm49, %v651, 0
    %660 = vmatpush.bf16.msra.mxu0 0
    %661 = vmatpush.bf16.msra.mxu0 0
    %662 = vmatpush.bf16.msra.mxu0 0
    %663 = vmatpush.bf16.msra.mxu0 0
    %664 = vmatpush.bf16.msra.mxu0 0
    %665 = vmatpush.bf16.msra.mxu0 0
    %666 = vmatpush.bf16.msra.mxu0 %v647
    %667 = vmatpush.bf16.msra.mxu0 %v645
    %668 = vmatmul.bf16.gmra.mxu0 %v658
    %v669 = vpop.f32.mrf.mxu0
    %v670 = vadd.f32 %v653, %v669
    %v671 = vpop.f32.mrf.mxu0
    %672 = vdwg.mxu0
    %673 = vmatpush.bf16.msra.mxu0 0
    %674 = vmatpush.bf16.msra.mxu0 0
    %675 = vmatpush.bf16.msra.mxu0 0
    %676 = vmatpush.bf16.msra.mxu0 0
    %677 = vmatpush.bf16.msra.mxu0 0
    %678 = vmatpush.bf16.msra.mxu0 0
    %679 = vmatpush.bf16.msra.mxu0 %v648
    %680 = vmatpush.bf16.msra.mxu0 %v646
    %681 = vmatmul.bf16.gmra.mxu0 %v658
    %v682 = vpop.f32.mrf.mxu0
    %v683 = vadd.f32 %v654, %v682
    %v684 = vpop.f32.mrf.mxu0
    %685 = vdwg.mxu0
    %v686 = vmax.f32 %v670, 0.0
    %v687 = vmax.f32 %v683, 0.0
    %v688 = vld [vmem:[#allocation5 + $0x50] sm:$0xff]
    %v689 = vld [vmem:[#allocation5 + $0x58] sm:$0xff]
    %v690 = vpack.c.bf16 %v688, %v688
    %v691 = vpack.c.bf16 %v689, %v689
    %v692 = vld [vmem:[#allocation2 + $0x21f] sm:$0x1]
    %v693 = vpack.c.bf16 %v686, %v686
    %v694 = vpack.c.bf16 %v687, %v687
    %v695 = vperm.slane %v692, 0
    %696 = vmatpush.bf16.xpose.msra.mxu0 0
    %697 = vmatpush.bf16.xpose.msra.mxu0 0
    %698 = vmatpush.bf16.xpose.msra.mxu0 0
    %699 = vmatpush.bf16.xpose.msra.mxu0 0
    %700 = vmatpush.bf16.xpose.msra.mxu0 0
    %701 = vmatpush.bf16.xpose.msra.mxu0 0
    %702 = vmatpush.bf16.xpose.msra.mxu0 0
    %703 = vmatpush.bf16.xpose.msra.mxu0 %v690
    %704 = vmatmul.bf16.gmra.mxu0 %v693
    %v705 = vpop.f32.mrf.mxu0
    %v706 = vadd.f32 %v695, %v705
    %v707 = vpop.f32.mrf.mxu0
    %708 = vdwg.mxu0
    %709 = vmatpush.bf16.xpose.msra.mxu0 0
    %710 = vmatpush.bf16.xpose.msra.mxu0 0
    %711 = vmatpush.bf16.xpose.msra.mxu0 0
    %712 = vmatpush.bf16.xpose.msra.mxu0 0
    %713 = vmatpush.bf16.xpose.msra.mxu0 0
    %714 = vmatpush.bf16.xpose.msra.mxu0 0
    %715 = vmatpush.bf16.xpose.msra.mxu0 0
    %716 = vmatpush.bf16.xpose.msra.mxu0 %v691
    %717 = vmatmul.bf16.gmra.mxu0 %v694
    %v718 = vpop.f32.mrf.mxu0
    %v719 = vadd.f32 %v706, %v718
    %v720 = vpop.f32.mrf.mxu0
    %721 = vdwg.mxu0
    %vm722 = vcmask 58368
    %723 = vst.msk [vmem:[#allocation7] sm:$0x3] %vm722, %v719
    // Predicated region
    $region18: #{tpu_custom_call.1} parent=1 // pred_check
      _
    $region19: #{tpu_custom_call.1} parent=1 // pred_check_branch
      %725 = sbr.rel (0) target = $region21
    $region20: #{tpu_custom_call.1} parent=1 // pred_region
      %727 = vsyncadd [#allocation4], 0
      %s729 = sshll.u32 [#allocation7], 4
      %s730 = int_to_ptr.vmem [resolvable:$true] %s729
      %s731 = sshll.u32 %s2, 4
      %s732 = int_to_ptr.hbm [resolvable:$true] %s731
      %734 = dma.vmem_to_hbm [thread:$0]  %s730, 32, %s732, [#allocation4]
    $region21: #{tpu_custom_call.1} parent=1 // pred_fallthru
      _
    // Predicated region
    $region22: #{tpu_custom_call.1} parent=1 // pred_check
      _
    $region23: #{tpu_custom_call.1} parent=1 // pred_check_branch
      %736 = sbr.rel (0) target = $region25
    $region24: #{tpu_custom_call.1} parent=1 // pred_region
      %738 = dma.done [#allocation4], 32
    $region25: #{tpu_custom_call.1} parent=1 // pred_fallthru
      _
    %739 = vsyncpa [#allocation3], 1
    %740 = vsyncpa [#allocation6], 1
    %741 = vsyncpa [#allocation4], 1

</llo_original>
